<compile_context>
chip_gen: v7x
topology: tpu7x:2x2x1
jax: 0.10.0
libtpu: 0.0.40
codegen_flags: <defaults>
</compile_context>

<pallas_src>
import jax
import jax.numpy as jnp
from jax import lax
from jax.experimental import pallas as pl
from jax.experimental.pallas import tpu as pltpu


def _levelset_acc_kernel(out_ref, tar_ref, num_ref, s2_ref, den_ref):
    """Accumulate the three reductions over one spatial tile.

    out_ref : (B, C, tile)   prediction tile
    tar_ref : (B, T, tile)   target tile (all target channels at once)
    num_ref : (1, B, T, C)   accumulator: sum_n t   * o
    s2_ref  : (1, B, T, C)   accumulator: sum_n t^2 * o
    den_ref : (1, B, C)      accumulator: sum_n o
    """
    j = pl.program_id(1)

    @pl.when(j == 0)
    def _init():
        num_ref[...] = jnp.zeros_like(num_ref)
        s2_ref[...] = jnp.zeros_like(s2_ref)
        den_ref[...] = jnp.zeros_like(den_ref)

    o = out_ref[...].astype(jnp.float32)            # (B, C, n)
    t = tar_ref[...].astype(jnp.float32)            # (B, T, n)

    # Batched MXU contraction over the spatial (lane) axis:
    #   (B, T, n) x (B, C, n) -> (B, T, C)
    dn = (((2,), (2,)), ((0,), (0,)))
    num = lax.dot_general(t, o, dn, preferred_element_type=jnp.float32)
    s2 = lax.dot_general(t * t, o, dn, preferred_element_type=jnp.float32)
    # TODO(synk): den could be folded into the same MXU call by stacking a ones
    # row onto the LHS; kept as a cheap lane-reduce for lowering robustness.

    num_ref[...] += num[None]
    s2_ref[...] += s2[None]
    den_ref[...] += jnp.sum(o, axis=-1)[None]       # (1, B, C)


def _vmem_capacity_bytes():
    try:
        return int(pltpu.get_tpu_info().vmem_capacity_bytes)
    except Exception:
        return 64 << 20  # v7x per-TensorCore VMEM (smallest across generations)


def _pick_spatial_tile(n, b, c, t, budget_bytes):
    """Largest lane-dense (multiple-of-128) tile whose per-step VMEM footprint
    (double-buffered input blocks + in-kernel f32 temporaries) fits the budget."""
    per_elem = 4 * b * (3 * (c + t) + t + 2)         # VMEM bytes per spatial element
    max_tile = (budget_bytes // max(per_elem, 1)) // 128 * 128
    max_tile = max(128, min(max_tile, 32768))        # 8K-32K elems amortize step cost
    n_lane = pl.cdiv(n, 128) * 128                   # no need to exceed (padded) N
    return min(max_tile, n_lane), per_elem


def levelset_loss(output_tensor, target):
    """output_tensor: (B, C, H, W), target: (B, T, H, W) -> scalar f32 loss."""
    B, C, H, W = output_tensor.shape
    Bt, T, Ht, Wt = target.shape
    assert (Bt, Ht, Wt) == (B, H, W)

    N = H * W
    o = output_tensor.reshape(B, C, N)
    t = target.reshape(B, T, N)

    cap = _vmem_capacity_bytes()
    tile, per_elem = _pick_spatial_tile(N, B, C, T, budget_bytes=cap // 2)

    # 2-way "parallel" split keeps both v7x TensorCores busy; on single-core
    # chips it is just two serial outer iterations with per-split accumulators.
    raw_tiles = pl.cdiv(N, tile)
    n_splits = 2 if raw_tiles >= 2 else 1
    tiles_per_split = pl.cdiv(raw_tiles, n_splits)
    n_pad = tiles_per_split * n_splits * tile

    if n_pad != N:
        # Zero padding is exact: o == 0 contributes nothing to den/num/s2.
        pad = n_pad - N
        o = jnp.pad(o, ((0, 0), (0, 0), (0, pad)))
        t = jnp.pad(t, ((0, 0), (0, 0), (0, pad)))

    vmem_limit = int(min(cap * 3 // 4, max(2 * per_elem * tile, 32 << 20)))
    vmem_limit = max(vmem_limit, 16 << 20)

    num_acc, s2_acc, den_acc = pl.pallas_call(
        _levelset_acc_kernel,
        out_shape=(
            jax.ShapeDtypeStruct((n_splits, B, T, C), jnp.float32),
            jax.ShapeDtypeStruct((n_splits, B, T, C), jnp.float32),
            jax.ShapeDtypeStruct((n_splits, B, C), jnp.float32),
        ),
        grid=(n_splits, tiles_per_split),
        in_specs=[
            pl.BlockSpec((B, C, tile),
                         lambda p, j: (0, 0, p * tiles_per_split + j)),
            pl.BlockSpec((B, T, tile),
                         lambda p, j: (0, 0, p * tiles_per_split + j)),
        ],
        out_specs=(
            pl.BlockSpec((1, B, T, C), lambda p, j: (p, 0, 0, 0)),
            pl.BlockSpec((1, B, T, C), lambda p, j: (p, 0, 0, 0)),
            pl.BlockSpec((1, B, C), lambda p, j: (p, 0, 0)),
        ),
        compiler_params=pltpu.CompilerParams(
            dimension_semantics=("parallel", "arbitrary"),
            vmem_limit_bytes=vmem_limit,
        ),
    )(o, t)

    # Tiny O(B*T*C) epilogue: combine per-split accumulators, finish the loss.
    num = jnp.sum(num_acc, axis=0)                       # (B, T, C)
    s2 = jnp.sum(s2_acc, axis=0)                         # (B, T, C)
    den = jnp.sum(den_acc, axis=0)                       # (B, C)
    # No epsilon, matching PyTorch's division by sum_hw(output).
    per_btc = s2 - (num * num) / den[:, None, :]         # (B, T, C)
    # torch.mean over the channel-summed (B, H, W) tensor -> divide by B*H*W.
    return jnp.sum(per_btc) / jnp.float32(B * N)


def levelset_loss_ref(output, target):
    """Plain-JAX reference mirroring the PyTorch forward."""
    loss = 0.0
    for ich in range(target.shape[1]):
        tch = target[:, ich:ich + 1]                                 # (B,1,H,W)
        cent = (jnp.sum(tch * output, axis=(2, 3))
                / jnp.sum(output, axis=(2, 3)))                      # (B, C)
        plevel = tch - cent[:, :, None, None]
        loss = loss + plevel * plevel * output
    return jnp.mean(jnp.sum(loss, axis=1))


if __name__ == "__main__":
    key = jax.random.PRNGKey(0)
    k1, k2 = jax.random.split(key)

    B, C_OUT, C_TAR, H, W = 2, 4, 3, 16, 16
    # Softmax over channels gives a realistic (positive) prediction tensor.
    output_tensor = jax.nn.softmax(
        jax.random.normal(k1, (B, C_OUT, H, W), dtype=jnp.float32), axis=1)
    target = jax.random.uniform(k2, (B, C_TAR, H, W), dtype=jnp.float32)

    loss = jax.block_until_ready(levelset_loss(output_tensor, target))
    ref = jax.block_until_ready(levelset_loss_ref(output_tensor, target))

    assert jnp.allclose(loss, ref, rtol=1e-4, atol=1e-5), (loss, ref)
    print("KERNEL_OK")
</pallas_src>

<mosaic_0001>
module attributes {stable_mosaic.version = 11 : i64} {
  func.func @_levelset_acc_kernel(%arg0: i32, %arg1: i32, %arg2: memref<2x4x256xf32, #tpu.memory_space<vmem>>, %arg3: memref<2x3x256xf32, #tpu.memory_space<vmem>>, %arg4: memref<1x2x3x4xf32, #tpu.memory_space<vmem>>, %arg5: memref<1x2x3x4xf32, #tpu.memory_space<vmem>>, %arg6: memref<1x2x4xf32, #tpu.memory_space<vmem>>) attributes {dimension_semantics = [#tpu.dimension_semantics<parallel>, #tpu.dimension_semantics<arbitrary>], iteration_bounds = array<i64: 1, 1>, scalar_prefetch = 0 : i64, scratch_operands = 0 : i64, tpu.core_type = #tpu.core_type<tc>, window_params = [{transform_indices = @transform_0, window_bounds = array<i64: 2, 4, 256>}, {transform_indices = @transform_1, window_bounds = array<i64: 2, 3, 256>}, {transform_indices = @transform_2, window_bounds = array<i64: 1, 2, 3, 4>}, {transform_indices = @transform_3, window_bounds = array<i64: 1, 2, 3, 4>}, {transform_indices = @transform_4, window_bounds = array<i64: 1, 2, 4>}]} {
    %c0_i32 = arith.constant 0 : i32
    %0 = arith.cmpi eq, %arg1, %c0_i32 : i32
    %1 = arith.extui %0 : i1 to i32
    %c0_i32_0 = arith.constant 0 : i32
    %2 = arith.cmpi ne, %1, %c0_i32_0 : i32
    scf.if %2 {
      %cst_30 = arith.constant 0.000000e+00 : f32
      %21 = vector.broadcast %cst_30 : f32 to vector<1x2x3x4xf32>
      %c0_31 = arith.constant 0 : index
      %c0_32 = arith.constant 0 : index
      %c0_33 = arith.constant 0 : index
      %c0_34 = arith.constant 0 : index
      %22 = vector.load %arg4[%c0_31, %c0_32, %c0_33, %c0_34] : memref<1x2x3x4xf32, #tpu.memory_space<vmem>>, vector<1x2x3x4xf32>
      tpu.vector_store %arg4[%c0_31, %c0_32, %c0_33, %c0_34], %21 {strides = array<i32>} : memref<1x2x3x4xf32, #tpu.memory_space<vmem>>, vector<1x2x3x4xf32>,
      %cst_35 = arith.constant 0.000000e+00 : f32
      %23 = vector.broadcast %cst_35 : f32 to vector<1x2x3x4xf32>
      %c0_36 = arith.constant 0 : index
      %c0_37 = arith.constant 0 : index
      %c0_38 = arith.constant 0 : index
      %c0_39 = arith.constant 0 : index
      %24 = vector.load %arg5[%c0_36, %c0_37, %c0_38, %c0_39] : memref<1x2x3x4xf32, #tpu.memory_space<vmem>>, vector<1x2x3x4xf32>
      tpu.vector_store %arg5[%c0_36, %c0_37, %c0_38, %c0_39], %23 {strides = array<i32>} : memref<1x2x3x4xf32, #tpu.memory_space<vmem>>, vector<1x2x3x4xf32>,
      %cst_40 = arith.constant 0.000000e+00 : f32
      %25 = vector.broadcast %cst_40 : f32 to vector<1x2x4xf32>
      %c0_41 = arith.constant 0 : index
      %c0_42 = arith.constant 0 : index
      %c0_43 = arith.constant 0 : index
      %26 = vector.load %arg6[%c0_41, %c0_42, %c0_43] : memref<1x2x4xf32, #tpu.memory_space<vmem>>, vector<1x2x4xf32>
      tpu.vector_store %arg6[%c0_41, %c0_42, %c0_43], %25 {strides = array<i32>} : memref<1x2x4xf32, #tpu.memory_space<vmem>>, vector<1x2x4xf32>,
    } else {
    }
    %c0 = arith.constant 0 : index
    %c0_1 = arith.constant 0 : index
    %c0_2 = arith.constant 0 : index
    %3 = vector.load %arg2[%c0, %c0_1, %c0_2] : memref<2x4x256xf32, #tpu.memory_space<vmem>>, vector<2x4x256xf32>
    %c0_3 = arith.constant 0 : index
    %c0_4 = arith.constant 0 : index
    %c0_5 = arith.constant 0 : index
    %4 = vector.load %arg3[%c0_3, %c0_4, %c0_5] : memref<2x3x256xf32, #tpu.memory_space<vmem>>, vector<2x3x256xf32>
    %cst = arith.constant dense<0.000000e+00> : vector<2x3x4xf32>
    %5 = tpu.matmul %4, %3, %cst {dimension_numbers = #tpu.dot_dimension_numbers<[2], [2], [1], [1], [0, 0, 0, 1, 1, 1], [0], [0]>} : vector<2x3x256xf32>, vector<2x4x256xf32>, vector<2x3x4xf32> -> vector<2x3x4xf32>
    %6 = arith.mulf %4, %4 : vector<2x3x256xf32>
    %cst_6 = arith.constant dense<0.000000e+00> : vector<2x3x4xf32>
    %7 = tpu.matmul %6, %3, %cst_6 {dimension_numbers = #tpu.dot_dimension_numbers<[2], [2], [1], [1], [0, 0, 0, 1, 1, 1], [0], [0]>} : vector<2x3x256xf32>, vector<2x4x256xf32>, vector<2x3x4xf32> -> vector<2x3x4xf32>
    %c0_7 = arith.constant 0 : index
    %c0_8 = arith.constant 0 : index
    %c0_9 = arith.constant 0 : index
    %c0_10 = arith.constant 0 : index
    %8 = vector.load %arg4[%c0_7, %c0_8, %c0_9, %c0_10] : memref<1x2x3x4xf32, #tpu.memory_space<vmem>>, vector<1x2x3x4xf32>
    %9 = vector.shape_cast %5 : vector<2x3x4xf32> to vector<1x2x3x4xf32>
    %10 = arith.addf %8, %9 : vector<1x2x3x4xf32>
    %c0_11 = arith.constant 0 : index
    %c0_12 = arith.constant 0 : index
    %c0_13 = arith.constant 0 : index
    %c0_14 = arith.constant 0 : index
    %11 = vector.load %arg4[%c0_11, %c0_12, %c0_13, %c0_14] : memref<1x2x3x4xf32, #tpu.memory_space<vmem>>, vector<1x2x3x4xf32>
    tpu.vector_store %arg4[%c0_11, %c0_12, %c0_13, %c0_14], %10 {strides = array<i32>} : memref<1x2x3x4xf32, #tpu.memory_space<vmem>>, vector<1x2x3x4xf32>,
    %c0_15 = arith.constant 0 : index
    %c0_16 = arith.constant 0 : index
    %c0_17 = arith.constant 0 : index
    %c0_18 = arith.constant 0 : index
    %12 = vector.load %arg5[%c0_15, %c0_16, %c0_17, %c0_18] : memref<1x2x3x4xf32, #tpu.memory_space<vmem>>, vector<1x2x3x4xf32>
    %13 = vector.shape_cast %7 : vector<2x3x4xf32> to vector<1x2x3x4xf32>
    %14 = arith.addf %12, %13 : vector<1x2x3x4xf32>
    %c0_19 = arith.constant 0 : index
    %c0_20 = arith.constant 0 : index
    %c0_21 = arith.constant 0 : index
    %c0_22 = arith.constant 0 : index
    %15 = vector.load %arg5[%c0_19, %c0_20, %c0_21, %c0_22] : memref<1x2x3x4xf32, #tpu.memory_space<vmem>>, vector<1x2x3x4xf32>
    tpu.vector_store %arg5[%c0_19, %c0_20, %c0_21, %c0_22], %14 {strides = array<i32>} : memref<1x2x3x4xf32, #tpu.memory_space<vmem>>, vector<1x2x3x4xf32>,
    %c0_23 = arith.constant 0 : index
    %c0_24 = arith.constant 0 : index
    %c0_25 = arith.constant 0 : index
    %16 = vector.load %arg6[%c0_23, %c0_24, %c0_25] : memref<1x2x4xf32, #tpu.memory_space<vmem>>, vector<1x2x4xf32>
    %cst_26 = arith.constant dense<0.000000e+00> : vector<2x4xf32>
    %17 = vector.multi_reduction <add>, %3, %cst_26 [2] : vector<2x4x256xf32> to vector<2x4xf32>
    %18 = vector.shape_cast %17 : vector<2x4xf32> to vector<1x2x4xf32>
    %19 = arith.addf %16, %18 : vector<1x2x4xf32>
    %c0_27 = arith.constant 0 : index
    %c0_28 = arith.constant 0 : index
    %c0_29 = arith.constant 0 : index
    %20 = vector.load %arg6[%c0_27, %c0_28, %c0_29] : memref<1x2x4xf32, #tpu.memory_space<vmem>>, vector<1x2x4xf32>
    tpu.vector_store %arg6[%c0_27, %c0_28, %c0_29], %19 {strides = array<i32>} : memref<1x2x4xf32, #tpu.memory_space<vmem>>, vector<1x2x4xf32>,
    return
  }
  func.func @transform_0(%arg0: i32, %arg1: i32) -> (i32, i32, i32) {
    %c1_i32 = arith.constant 1 : i32
    %0 = arith.muli %arg0, %c1_i32 : i32
    %1 = arith.addi %0, %arg1 : i32
    %c0_i32 = arith.constant 0 : i32
    %c0_i32_0 = arith.constant 0 : i32
    %c0_i32_1 = arith.constant 0 : i32
    return %c0_i32, %c0_i32_0, %1 : i32, i32, i32
  }
  func.func @transform_1(%arg0: i32, %arg1: i32) -> (i32, i32, i32) {
    %c1_i32 = arith.constant 1 : i32
    %0 = arith.muli %arg0, %c1_i32 : i32
    %1 = arith.addi %0, %arg1 : i32
    %c0_i32 = arith.constant 0 : i32
    %c0_i32_0 = arith.constant 0 : i32
    %c0_i32_1 = arith.constant 0 : i32
    return %c0_i32, %c0_i32_0, %1 : i32, i32, i32
  }
  func.func @transform_2(%arg0: i32, %arg1: i32) -> (i32, i32, i32, i32) {
    %c0_i32 = arith.constant 0 : i32
    %c0_i32_0 = arith.constant 0 : i32
    %c0_i32_1 = arith.constant 0 : i32
    %c0_i32_2 = arith.constant 0 : i32
    return %arg0, %c0_i32, %c0_i32_0, %c0_i32_1 : i32, i32, i32, i32
  }
  func.func @transform_3(%arg0: i32, %arg1: i32) -> (i32, i32, i32, i32) {
    %c0_i32 = arith.constant 0 : i32
    %c0_i32_0 = arith.constant 0 : i32
    %c0_i32_1 = arith.constant 0 : i32
    %c0_i32_2 = arith.constant 0 : i32
    return %arg0, %c0_i32, %c0_i32_0, %c0_i32_1 : i32, i32, i32, i32
  }
  func.func @transform_4(%arg0: i32, %arg1: i32) -> (i32, i32, i32) {
    %c0_i32 = arith.constant 0 : i32
    %c0_i32_0 = arith.constant 0 : i32
    %c0_i32_1 = arith.constant 0 : i32
    return %arg0, %c0_i32, %c0_i32_0 : i32, i32, i32
  }
}

</mosaic_0001>

<llo_original>
// kernel: tpu_custom_call.1
$region0: #{tpu_custom_call.1}
  #allocation0 [shape = 'u32[]', space=smem, size = 0x4, offset = 0x4, fixed_abs, tag = 'smem constant byte address 0x4 - core index']
  #allocation1 [shape = 'u32[144,128]{1,0:T(1,128)}', space=vmem, size = 0x12000, scoped, tag = 'internal scratch']
  %s0 = inlined_call_operand.vmem [shape: f32[2,4,256], index: 0, kind: input, shape index: {}]
  %s1 = inlined_call_operand.vmem [shape: f32[2,3,256], index: 1, kind: input, shape index: {}]
  %s2 = inlined_call_operand.vmem [shape: f32[1,2,3,4], index: 2, kind: output, shape index: {0}]
  %s3 = inlined_call_operand.vmem [shape: f32[1,2,3,4], index: 3, kind: output, shape index: {1}]
  %s4 = inlined_call_operand.hbm [shape: f32[1,2,4], index: 4, kind: output, shape index: {2}]
  %5 = xla_tuple %s2, %s3, %s4
  %s6 = sld [smem:[#allocation0]]
  $region38: #{tpu_custom_call.1} parent=0
    _
  %s8 = ssub.s32 1, %s6
  %s9 = scalar_select 0, %s8, %s6
  $region1: #{tpu_custom_call.1} parent=0
    #allocation2 [shape = 'u8[1024]{0}', space=vmem, size = 0x400, scoped, tag = 'output window, operand 2, single buffered']
    #allocation3 [shape = 's32[1]{0}', space=sflag, size = 0x4, scoped, tag = 'scoped memory for tpu_custom_call.1']
    %10 = vsyncpa [#allocation3], 0
    // Predicated region
    $region2: #{tpu_custom_call.1} parent=1 // pred_check
      _
    $region3: #{tpu_custom_call.1} parent=1 // pred_check_branch
      %12 = sbr.rel (0) target = $region5
    $region4: #{tpu_custom_call.1} parent=1 // pred_region
      %s13 = sadd.s32 0, 0
      %s14 = smul.u32 2, %s13
      %p15 = scmp.lt.s32.totalorder %s14, 1
      %s16 = scalar_select %p15, %s14, 1
      %s17 = smul.addr %s16, 4
      %s18 = scalar_lea.vmem %s0, %s17
      %s19 = sadd.s32 0, 0
      %s20 = smul.u32 2, %s19
    $region5: #{tpu_custom_call.1} parent=1 // pred_fallthru
      _
    // Predicated region
    $region6: #{tpu_custom_call.1} parent=1 // pred_check
      _
    $region7: #{tpu_custom_call.1} parent=1 // pred_check_branch
      %22 = sbr.rel (0) target = $region9
    $region8: #{tpu_custom_call.1} parent=1 // pred_region
      %s23 = sadd.s32 0, 0
      %s24 = smul.u32 2, %s23
      %p25 = scmp.lt.s32.totalorder %s24, 1
      %s26 = scalar_select %p25, %s24, 1
      %s27 = smul.addr %s26, 4
      %s28 = scalar_lea.vmem %s1, %s27
      %s29 = sadd.s32 0, 0
      %s30 = smul.u32 2, %s29
    $region9: #{tpu_custom_call.1} parent=1 // pred_fallthru
      _
    %s31 = sadd.s32 0, 0
    %s32 = smul.u32 2, %s31
    %p33 = scmp.lt.s32.totalorder %s32, 1
    %s34 = scalar_select %p33, %s32, 1
    %s35 = smul.addr %s34, 4
    %s36 = scalar_lea.vmem %s0, %s35
    %s37 = sadd.s32 0, 0
    %s38 = smul.u32 2, %s37
    %p39 = scmp.lt.s32.totalorder %s38, 1
    %s40 = scalar_select %p39, %s38, 1
    %s41 = smul.addr %s40, 4
    %s42 = scalar_lea.vmem %s1, %s41
    %s43 = sadd.s32 0, 0
    %s44 = smul.u32 2, %s43
    %p45 = scmp.lt.s32.totalorder %s44, 1
    %s46 = scalar_select %p45, %s44, 1
    %s47 = smul.addr %s46, 4
    %s48 = scalar_lea.vmem %s0, %s47
    %s49 = sadd.s32 0, 0
    %s50 = smul.u32 2, %s49
    %s51 = sadd.s32 0, 0
    %s52 = smul.u32 2, %s51
    %p53 = scmp.lt.s32.totalorder %s52, 1
    %s54 = scalar_select %p53, %s52, 1
    %s55 = smul.addr %s54, 4
    %s56 = scalar_lea.vmem %s1, %s55
    %s57 = sadd.s32 0, 0
    %s58 = smul.u32 2, %s57
    %p59 = scmp.eq.s32.totalorder 0, 0
    // Predicated region
    $region10: #{tpu_custom_call.1} parent=1 // pred_check
      %p60 = pneg %p59
    $region11: #{tpu_custom_call.1} parent=1 // pred_check_branch
      %62 = sbr.rel (%p60) target = $region13
    $region12: #{tpu_custom_call.1} parent=1 // pred_region
      %vm63 = vcmask 26624
      %64 = vst.msk [vmem:[%s2] sm:$0x7] %vm63, 0.0
      %65 = vst.msk [vmem:[%s2 + $0x4] sm:$0x7] %vm63, 0.0
      %66 = vst.msk [vmem:[%s3] sm:$0x7] %vm63, 0.0
      %67 = vst.msk [vmem:[%s3 + $0x4] sm:$0x7] %vm63, 0.0
      %vm68 = vcmask 25600
      %69 = vst.msk [vmem:[#allocation2] sm:$0x3] %vm68, 0.0
    $region13: #{tpu_custom_call.1} parent=1 // pred_fallthru
      _
    %v70 = vld [vmem:[%s48] sm:$0xff]
    %v71 = vld [vmem:[%s48 + $0x8] sm:$0xff]
    %v72 = vld [vmem:[%s56] sm:$0x77]
    %v73 = vld [vmem:[%s56 + $0x8] sm:$0x77]
    %v75 = vcombine.high %v72, %v72
    %v78 = vcombine.high %v70, %v70
    %80 = vmatprep.subr.mxu0 %v78
    %81 = vmatpush1.xpose.msra.mxu0 %v70
    %82 = vmatprep.subr.mxu0 0.0
    %83 = vmatpush1.xpose.msra.mxu0 0.0
    %84 = vmatprep.subr.mxu0 0.0
    %85 = vmatpush1.xpose.msra.mxu0 0.0
    %86 = vmatprep.subr.mxu0 0.0
    %87 = vmatpush1.xpose.msra.mxu0 0.0
    %88 = vmatprep.subr.mxu0 0.0
    %89 = vmatpush1.xpose.msra.mxu0 0.0
    %90 = vmatprep.subr.mxu0 0.0
    %91 = vmatpush1.xpose.msra.mxu0 0.0
    %92 = vmatprep.subr.mxu0 0.0
    %93 = vmatpush1.xpose.msra.mxu0 0.0
    %94 = vmatprep.subr.mxu0 0.0
    %95 = vmatpush1.xpose.msra.mxu0 0.0
    %96 = vmatprep.subr.mxu0 0.0
    %97 = vmatpush1.xpose.msra.mxu0 0.0
    %98 = vmatprep.subr.mxu0 0.0
    %99 = vmatpush1.xpose.msra.mxu0 0.0
    %100 = vmatprep.subr.mxu0 0.0
    %101 = vmatpush1.xpose.msra.mxu0 0.0
    %102 = vmatprep.subr.mxu0 0.0
    %103 = vmatpush1.xpose.msra.mxu0 0.0
    %104 = vmatprep.subr.mxu0 0.0
    %105 = vmatpush1.xpose.msra.mxu0 0.0
    %106 = vmatprep.subr.mxu0 0.0
    %107 = vmatpush1.xpose.msra.mxu0 0.0
    %108 = vmatprep.subr.mxu0 0.0
    %109 = vmatpush1.xpose.msra.mxu0 0.0
    %110 = vmatprep.subr.mxu0 0.0
    %111 = vmatpush1.xpose.msra.mxu0 0.0
    %112 = vmatprep.subr.mxu0 0.0
    %113 = vmatpush1.xpose.msra.mxu0 0.0
    %114 = vmatprep.subr.mxu0 0.0
    %115 = vmatpush1.xpose.msra.mxu0 0.0
    %116 = vmatprep.subr.mxu0 0.0
    %117 = vmatpush1.xpose.msra.mxu0 0.0
    %118 = vmatprep.subr.mxu0 0.0
    %119 = vmatpush1.xpose.msra.mxu0 0.0
    %120 = vmatprep.subr.mxu0 0.0
    %121 = vmatpush1.xpose.msra.mxu0 0.0
    %122 = vmatprep.subr.mxu0 0.0
    %123 = vmatpush1.xpose.msra.mxu0 0.0
    %124 = vmatprep.subr.mxu0 0.0
    %125 = vmatpush1.xpose.msra.mxu0 0.0
    %126 = vmatprep.subr.mxu0 0.0
    %127 = vmatpush1.xpose.msra.mxu0 0.0
    %128 = vmatprep.subr.mxu0 0.0
    %129 = vmatpush1.xpose.msra.mxu0 0.0
    %130 = vmatprep.subr.mxu0 0.0
    %131 = vmatpush1.xpose.msra.mxu0 0.0
    %132 = vmatprep.subr.mxu0 0.0
    %133 = vmatpush1.xpose.msra.mxu0 0.0
    %134 = vmatprep.subr.mxu0 0.0
    %135 = vmatpush1.xpose.msra.mxu0 0.0
    %136 = vmatprep.subr.mxu0 0.0
    %137 = vmatpush1.xpose.msra.mxu0 0.0
    %138 = vmatprep.subr.mxu0 0.0
    %139 = vmatpush1.xpose.msra.mxu0 0.0
    %140 = vmatprep.subr.mxu0 0.0
    %141 = vmatpush1.xpose.msra.mxu0 0.0
    %142 = vmatprep.subr.mxu0 0.0
    %143 = vmatpush1.xpose.msra.mxu0 0.0
    %144 = vmatprep.mubr.f32.mxu0 %v75
    %145 = vmatmul.mubr.f32.gmra.mrb[0].mxu0 %v72
    %v146 = vpop.f32.mrb[0].mxu0
    %v147 = vadd.f32 0.0, %v146
    %v148 = vpop.f32.mrb[0].mxu0
    %149 = vdwg.mxu0
    %v151 = vcombine.high %v73, %v73
    %v154 = vcombine.high %v71, %v71
    %156 = vmatprep.subr.mxu0 %v154
    %157 = vmatpush1.xpose.msra.mxu0 %v71
    %158 = vmatprep.subr.mxu0 0.0
    %159 = vmatpush1.xpose.msra.mxu0 0.0
    %160 = vmatprep.subr.mxu0 0.0
    %161 = vmatpush1.xpose.msra.mxu0 0.0
    %162 = vmatprep.subr.mxu0 0.0
    %163 = vmatpush1.xpose.msra.mxu0 0.0
    %164 = vmatprep.subr.mxu0 0.0
    %165 = vmatpush1.xpose.msra.mxu0 0.0
    %166 = vmatprep.subr.mxu0 0.0
    %167 = vmatpush1.xpose.msra.mxu0 0.0
    %168 = vmatprep.subr.mxu0 0.0
    %169 = vmatpush1.xpose.msra.mxu0 0.0
    %170 = vmatprep.subr.mxu0 0.0
    %171 = vmatpush1.xpose.msra.mxu0 0.0
    %172 = vmatprep.subr.mxu0 0.0
    %173 = vmatpush1.xpose.msra.mxu0 0.0
    %174 = vmatprep.subr.mxu0 0.0
    %175 = vmatpush1.xpose.msra.mxu0 0.0
    %176 = vmatprep.subr.mxu0 0.0
    %177 = vmatpush1.xpose.msra.mxu0 0.0
    %178 = vmatprep.subr.mxu0 0.0
    %179 = vmatpush1.xpose.msra.mxu0 0.0
    %180 = vmatprep.subr.mxu0 0.0
    %181 = vmatpush1.xpose.msra.mxu0 0.0
    %182 = vmatprep.subr.mxu0 0.0
    %183 = vmatpush1.xpose.msra.mxu0 0.0
    %184 = vmatprep.subr.mxu0 0.0
    %185 = vmatpush1.xpose.msra.mxu0 0.0
    %186 = vmatprep.subr.mxu0 0.0
    %187 = vmatpush1.xpose.msra.mxu0 0.0
    %188 = vmatprep.subr.mxu0 0.0
    %189 = vmatpush1.xpose.msra.mxu0 0.0
    %190 = vmatprep.subr.mxu0 0.0
    %191 = vmatpush1.xpose.msra.mxu0 0.0
    %192 = vmatprep.subr.mxu0 0.0
    %193 = vmatpush1.xpose.msra.mxu0 0.0
    %194 = vmatprep.subr.mxu0 0.0
    %195 = vmatpush1.xpose.msra.mxu0 0.0
    %196 = vmatprep.subr.mxu0 0.0
    %197 = vmatpush1.xpose.msra.mxu0 0.0
    %198 = vmatprep.subr.mxu0 0.0
    %199 = vmatpush1.xpose.msra.mxu0 0.0
    %200 = vmatprep.subr.mxu0 0.0
    %201 = vmatpush1.xpose.msra.mxu0 0.0
    %202 = vmatprep.subr.mxu0 0.0
    %203 = vmatpush1.xpose.msra.mxu0 0.0
    %204 = vmatprep.subr.mxu0 0.0
    %205 = vmatpush1.xpose.msra.mxu0 0.0
    %206 = vmatprep.subr.mxu0 0.0
    %207 = vmatpush1.xpose.msra.mxu0 0.0
    %208 = vmatprep.subr.mxu0 0.0
    %209 = vmatpush1.xpose.msra.mxu0 0.0
    %210 = vmatprep.subr.mxu0 0.0
    %211 = vmatpush1.xpose.msra.mxu0 0.0
    %212 = vmatprep.subr.mxu0 0.0
    %213 = vmatpush1.xpose.msra.mxu0 0.0
    %214 = vmatprep.subr.mxu0 0.0
    %215 = vmatpush1.xpose.msra.mxu0 0.0
    %216 = vmatprep.subr.mxu0 0.0
    %217 = vmatpush1.xpose.msra.mxu0 0.0
    %218 = vmatprep.subr.mxu0 0.0
    %219 = vmatpush1.xpose.msra.mxu0 0.0
    %220 = vmatprep.mubr.f32.mxu0 %v151
    %221 = vmatmul.mubr.f32.gmra.mrb[0].mxu0 %v73
    %v222 = vpop.f32.mrb[0].mxu0
    %v223 = vadd.f32 0.0, %v222
    %v224 = vpop.f32.mrb[0].mxu0
    %225 = vdwg.mxu0
    %v226 = vmul.f32 %v72, %v72
    %v227 = vmul.f32 %v73, %v73
    %v229 = vcombine.high %v226, %v226
    %231 = vmatprep.subr.mxu0 %v78
    %232 = vmatpush1.xpose.msra.mxu0 %v70
    %233 = vmatprep.subr.mxu0 0.0
    %234 = vmatpush1.xpose.msra.mxu0 0.0
    %235 = vmatprep.subr.mxu0 0.0
    %236 = vmatpush1.xpose.msra.mxu0 0.0
    %237 = vmatprep.subr.mxu0 0.0
    %238 = vmatpush1.xpose.msra.mxu0 0.0
    %239 = vmatprep.subr.mxu0 0.0
    %240 = vmatpush1.xpose.msra.mxu0 0.0
    %241 = vmatprep.subr.mxu0 0.0
    %242 = vmatpush1.xpose.msra.mxu0 0.0
    %243 = vmatprep.subr.mxu0 0.0
    %244 = vmatpush1.xpose.msra.mxu0 0.0
    %245 = vmatprep.subr.mxu0 0.0
    %246 = vmatpush1.xpose.msra.mxu0 0.0
    %247 = vmatprep.subr.mxu0 0.0
    %248 = vmatpush1.xpose.msra.mxu0 0.0
    %249 = vmatprep.subr.mxu0 0.0
    %250 = vmatpush1.xpose.msra.mxu0 0.0
    %251 = vmatprep.subr.mxu0 0.0
    %252 = vmatpush1.xpose.msra.mxu0 0.0
    %253 = vmatprep.subr.mxu0 0.0
    %254 = vmatpush1.xpose.msra.mxu0 0.0
    %255 = vmatprep.subr.mxu0 0.0
    %256 = vmatpush1.xpose.msra.mxu0 0.0
    %257 = vmatprep.subr.mxu0 0.0
    %258 = vmatpush1.xpose.msra.mxu0 0.0
    %259 = vmatprep.subr.mxu0 0.0
    %260 = vmatpush1.xpose.msra.mxu0 0.0
    %261 = vmatprep.subr.mxu0 0.0
    %262 = vmatpush1.xpose.msra.mxu0 0.0
    %263 = vmatprep.subr.mxu0 0.0
    %264 = vmatpush1.xpose.msra.mxu0 0.0
    %265 = vmatprep.subr.mxu0 0.0
    %266 = vmatpush1.xpose.msra.mxu0 0.0
    %267 = vmatprep.subr.mxu0 0.0
    %268 = vmatpush1.xpose.msra.mxu0 0.0
    %269 = vmatprep.subr.mxu0 0.0
    %270 = vmatpush1.xpose.msra.mxu0 0.0
    %271 = vmatprep.subr.mxu0 0.0
    %272 = vmatpush1.xpose.msra.mxu0 0.0
    %273 = vmatprep.subr.mxu0 0.0
    %274 = vmatpush1.xpose.msra.mxu0 0.0
    %275 = vmatprep.subr.mxu0 0.0
    %276 = vmatpush1.xpose.msra.mxu0 0.0
    %277 = vmatprep.subr.mxu0 0.0
    %278 = vmatpush1.xpose.msra.mxu0 0.0
    %279 = vmatprep.subr.mxu0 0.0
    %280 = vmatpush1.xpose.msra.mxu0 0.0
    %281 = vmatprep.subr.mxu0 0.0
    %282 = vmatpush1.xpose.msra.mxu0 0.0
    %283 = vmatprep.subr.mxu0 0.0
    %284 = vmatpush1.xpose.msra.mxu0 0.0
    %285 = vmatprep.subr.mxu0 0.0
    %286 = vmatpush1.xpose.msra.mxu0 0.0
    %287 = vmatprep.subr.mxu0 0.0
    %288 = vmatpush1.xpose.msra.mxu0 0.0
    %289 = vmatprep.subr.mxu0 0.0
    %290 = vmatpush1.xpose.msra.mxu0 0.0
    %291 = vmatprep.subr.mxu0 0.0
    %292 = vmatpush1.xpose.msra.mxu0 0.0
    %293 = vmatprep.subr.mxu0 0.0
    %294 = vmatpush1.xpose.msra.mxu0 0.0
    %295 = vmatprep.mubr.f32.mxu0 %v229
    %296 = vmatmul.mubr.f32.gmra.mrb[0].mxu0 %v226
    %v297 = vpop.f32.mrb[0].mxu0
    %v298 = vadd.f32 0.0, %v297
    %v299 = vpop.f32.mrb[0].mxu0
    %300 = vdwg.mxu0
    %v302 = vcombine.high %v227, %v227
    %304 = vmatprep.subr.mxu0 %v154
    %305 = vmatpush1.xpose.msra.mxu0 %v71
    %306 = vmatprep.subr.mxu0 0.0
    %307 = vmatpush1.xpose.msra.mxu0 0.0
    %308 = vmatprep.subr.mxu0 0.0
    %309 = vmatpush1.xpose.msra.mxu0 0.0
    %310 = vmatprep.subr.mxu0 0.0
    %311 = vmatpush1.xpose.msra.mxu0 0.0
    %312 = vmatprep.subr.mxu0 0.0
    %313 = vmatpush1.xpose.msra.mxu0 0.0
    %314 = vmatprep.subr.mxu0 0.0
    %315 = vmatpush1.xpose.msra.mxu0 0.0
    %316 = vmatprep.subr.mxu0 0.0
    %317 = vmatpush1.xpose.msra.mxu0 0.0
    %318 = vmatprep.subr.mxu0 0.0
    %319 = vmatpush1.xpose.msra.mxu0 0.0
    %320 = vmatprep.subr.mxu0 0.0
    %321 = vmatpush1.xpose.msra.mxu0 0.0
    %322 = vmatprep.subr.mxu0 0.0
    %323 = vmatpush1.xpose.msra.mxu0 0.0
    %324 = vmatprep.subr.mxu0 0.0
    %325 = vmatpush1.xpose.msra.mxu0 0.0
    %326 = vmatprep.subr.mxu0 0.0
    %327 = vmatpush1.xpose.msra.mxu0 0.0
    %328 = vmatprep.subr.mxu0 0.0
    %329 = vmatpush1.xpose.msra.mxu0 0.0
    %330 = vmatprep.subr.mxu0 0.0
    %331 = vmatpush1.xpose.msra.mxu0 0.0
    %332 = vmatprep.subr.mxu0 0.0
    %333 = vmatpush1.xpose.msra.mxu0 0.0
    %334 = vmatprep.subr.mxu0 0.0
    %335 = vmatpush1.xpose.msra.mxu0 0.0
    %336 = vmatprep.subr.mxu0 0.0
    %337 = vmatpush1.xpose.msra.mxu0 0.0
    %338 = vmatprep.subr.mxu0 0.0
    %339 = vmatpush1.xpose.msra.mxu0 0.0
    %340 = vmatprep.subr.mxu0 0.0
    %341 = vmatpush1.xpose.msra.mxu0 0.0
    %342 = vmatprep.subr.mxu0 0.0
    %343 = vmatpush1.xpose.msra.mxu0 0.0
    %344 = vmatprep.subr.mxu0 0.0
    %345 = vmatpush1.xpose.msra.mxu0 0.0
    %346 = vmatprep.subr.mxu0 0.0
    %347 = vmatpush1.xpose.msra.mxu0 0.0
    %348 = vmatprep.subr.mxu0 0.0
    %349 = vmatpush1.xpose.msra.mxu0 0.0
    %350 = vmatprep.subr.mxu0 0.0
    %351 = vmatpush1.xpose.msra.mxu0 0.0
    %352 = vmatprep.subr.mxu0 0.0
    %353 = vmatpush1.xpose.msra.mxu0 0.0
    %354 = vmatprep.subr.mxu0 0.0
    %355 = vmatpush1.xpose.msra.mxu0 0.0
    %356 = vmatprep.subr.mxu0 0.0
    %357 = vmatpush1.xpose.msra.mxu0 0.0
    %358 = vmatprep.subr.mxu0 0.0
    %359 = vmatpush1.xpose.msra.mxu0 0.0
    %360 = vmatprep.subr.mxu0 0.0
    %361 = vmatpush1.xpose.msra.mxu0 0.0
    %362 = vmatprep.subr.mxu0 0.0
    %363 = vmatpush1.xpose.msra.mxu0 0.0
    %364 = vmatprep.subr.mxu0 0.0
    %365 = vmatpush1.xpose.msra.mxu0 0.0
    %366 = vmatprep.subr.mxu0 0.0
    %367 = vmatpush1.xpose.msra.mxu0 0.0
    %368 = vmatprep.mubr.f32.mxu0 %v302
    %369 = vmatmul.mubr.f32.gmra.mrb[0].mxu0 %v227
    %v370 = vpop.f32.mrb[0].mxu0
    %v371 = vadd.f32 0.0, %v370
    %v372 = vpop.f32.mrb[0].mxu0
    %373 = vdwg.mxu0
    %v374 = vld [vmem:[%s2] sm:$0x7]
    %v375 = vld [vmem:[%s2 + $0x4] sm:$0x7]
    %v376 = vadd.f32 %v374, %v147
    %v377 = vadd.f32 %v375, %v223
    %vm378 = vcmask 26624
    %379 = vst.msk [vmem:[%s2] sm:$0x7] %vm378, %v376
    %380 = vst.msk [vmem:[%s2 + $0x4] sm:$0x7] %vm378, %v377
    %v381 = vld [vmem:[%s3] sm:$0x7]
    %v382 = vld [vmem:[%s3 + $0x4] sm:$0x7]
    %v383 = vadd.f32 %v381, %v298
    %v384 = vadd.f32 %v382, %v371
    %385 = vst.msk [vmem:[%s3] sm:$0x7] %vm378, %v383
    %386 = vst.msk [vmem:[%s3 + $0x4] sm:$0x7] %vm378, %v384
    %v387 = vld [vmem:[#allocation2] sm:$0x3]
    %vm388 = vcmask 1043456
    %v389 = vsel %vm388, %v70, 0.0
    %v390 = vsel %vm388, %v78, 0.0
    %v391 = vadd.f32 %v389, %v390
    %392 = vadd.xlane.f32.xlu0 %v391
    %v393 = vpop.xlane.xlu0 %392
    %v394 = vsel %vm388, %v71, 0.0
    %v395 = vsel %vm388, %v154, 0.0
    %v396 = vadd.f32 %v394, %v395
    %397 = vadd.xlane.f32.xlu0 %v396
    %v398 = vpop.xlane.xlu0 %397
    %v401 = vlaneseq
    %v402 = vand.u32 %v401, 127
    %v403 = vlaneseq
    %v404 = vshrl.u32 %v403, 7
    %v405 = vsub.s32 %v402, %v404
    %v406 = vrot.slane %v393, %v405
    %v407 = vlaneseq
    %v408 = vshrl.u32 %v407, 7
    %v409 = vsub.s32 %v402, %v408
    %v410 = vrot.slane %v398, %v409
    %vm411 = vcmask 1041409
    %v412 = vsel %vm411, %v410, %v406
    %v414 = vadd.f32 %v387, %v412
    %vm415 = vcmask 25600
    %416 = vst.msk [vmem:[#allocation2] sm:$0x3] %vm415, %v414
    // Predicated region
    $region14: #{tpu_custom_call.1} parent=1 // pred_check
      _
    $region15: #{tpu_custom_call.1} parent=1 // pred_check_branch
      %418 = sbr.rel (0) target = $region17
    $region16: #{tpu_custom_call.1} parent=1 // pred_region
      _
    $region17: #{tpu_custom_call.1} parent=1 // pred_fallthru
      _
    // Predicated region
    $region18: #{tpu_custom_call.1} parent=1 // pred_check
      _
    $region19: #{tpu_custom_call.1} parent=1 // pred_check_branch
      %420 = sbr.rel (0) target = $region21
    $region20: #{tpu_custom_call.1} parent=1 // pred_region
      _
    $region21: #{tpu_custom_call.1} parent=1 // pred_fallthru
      _
    // Predicated region
    $region22: #{tpu_custom_call.1} parent=1 // pred_check
      _
    $region23: #{tpu_custom_call.1} parent=1 // pred_check_branch
      %422 = sbr.rel (0) target = $region25
    $region24: #{tpu_custom_call.1} parent=1 // pred_region
      %s424 = ssub.s32 32, 32
      %425 = vsyncadd [#allocation3], %s424
      %s427 = sshll.u32 [#allocation2], 4
      %s428 = int_to_ptr.vmem [resolvable:$true] %s427
      %430 = dma.vmem_to_hbm [thread:$0]  %s428, 32, %s4, [#allocation3]
    $region25: #{tpu_custom_call.1} parent=1 // pred_fallthru
      _
    // Predicated region
    $region26: #{tpu_custom_call.1} parent=1 // pred_check
      _
    $region27: #{tpu_custom_call.1} parent=1 // pred_check_branch
      %432 = sbr.rel (0) target = $region29
    $region28: #{tpu_custom_call.1} parent=1 // pred_region
      _
    $region29: #{tpu_custom_call.1} parent=1 // pred_fallthru
      _
    // Predicated region
    $region30: #{tpu_custom_call.1} parent=1 // pred_check
      _
    $region31: #{tpu_custom_call.1} parent=1 // pred_check_branch
      %434 = sbr.rel (0) target = $region33
    $region32: #{tpu_custom_call.1} parent=1 // pred_region
      _
    $region33: #{tpu_custom_call.1} parent=1 // pred_fallthru
      _
    // Predicated region
    $region34: #{tpu_custom_call.1} parent=1 // pred_check
      _
    $region35: #{tpu_custom_call.1} parent=1 // pred_check_branch
      %436 = sbr.rel (0) target = $region37
    $region36: #{tpu_custom_call.1} parent=1 // pred_region
      %437 = dma.done [#allocation3], 32
    $region37: #{tpu_custom_call.1} parent=1 // pred_fallthru
      _
    %438 = vsyncpa [#allocation3], 1

</llo_original>
